<compile_context>
chip_gen: v7x
topology: tpu7x:2x2x1
jax: 0.10.0
libtpu: 0.0.40
codegen_flags: <defaults>
</compile_context>

<pallas_src>
import functools

import jax
import jax.numpy as jnp
from jax.experimental import pallas as pl
from jax.experimental.pallas import tpu as pltpu


def _round_up(n, m):
    return ((n + m - 1) // m) * m


def _mlp_kernel(x_ref, w1_ref, b1_ref, w2_ref, b2_ref, o_ref, *, apply_softmax):
    """One batch tile of the fused 2-layer MLP forward pass."""
    x = x_ref[...]                                    # (TM, D_in)  compute dtype
    w1 = w1_ref[...]                                  # (D_in, H)   resident
    w2 = w2_ref[...]                                  # (H, D_out)  resident

    # fc1 + ReLU. MXU matmul with f32 accumulation; bias-add/ReLU in f32.
    h = jnp.dot(x, w1, preferred_element_type=jnp.float32) + b1_ref[...]
    h = jnp.maximum(h, 0.0)

    # fc2 (cast activations back to the weight dtype so the second matmul is
    # also bf16-native when compute_dtype=bf16; no-op for f32).
    h = h.astype(w2.dtype)
    logits = jnp.dot(h, w2, preferred_element_type=jnp.float32) + b2_ref[...]

    if apply_softmax:
        m = jnp.max(logits, axis=-1, keepdims=True)
        e = jnp.exp(logits - m)
        denom = jnp.sum(e, axis=-1, keepdims=True)
        # approx reciprocal -> EUP slot; rows sum to 1 within ~1e-3.
        logits = e * pl.reciprocal(denom, approx=True)

    o_ref[...] = logits.astype(o_ref.dtype)


def prepare_params(w1, b1, w2, b2, compute_dtype=jnp.bfloat16):
    """One-time parameter prep (do at model-load time, not per forward).

    Weights are cast to the compute dtype (bf16 halves their DMA bytes and is
    MXU-native on v6e/v7x); biases stay f32 and are reshaped to (1, dim).
    """
    return {
        "w1": jnp.asarray(w1, compute_dtype),
        "b1": jnp.asarray(b1, jnp.float32).reshape(1, -1),
        "w2": jnp.asarray(w2, compute_dtype),
        "b2": jnp.asarray(b2, jnp.float32).reshape(1, -1),
    }


def _choose_batch_tile(batch, block_m):
    """Pick the batch tile: big enough to amortize per-step overhead, but keep
    grid_m >= 2 when possible so v7x's two TensorCores both get work."""
    if batch <= 8:
        # Full-extent block (legal even if not a multiple of 8); grid of 1.
        return batch, batch, 1
    half = _round_up((batch + 1) // 2, 8)
    tm = max(8, min(block_m, half))
    batch_p = _round_up(batch, tm)
    return tm, batch_p, batch_p // tm


def surname_classifier_forward(x, params, apply_softmax=False, block_m=1024):
    """Fused Pallas forward pass of the 2-layer surname classifier.

    Args:
      x: (batch, input_dim) array.
      params: dict from prepare_params (w1 (D_in,H), b1 (1,H), w2 (H,D_out),
              b2 (1,D_out)); weights transposed from the PyTorch layout.
      apply_softmax: if True, softmax over dim=1 of the logits.
      block_m: max batch tile size (rows per grid step).
    Returns:
      (batch, output_dim) float32.
    """
    w1, b1, w2, b2 = params["w1"], params["b1"], params["w2"], params["b2"]
    batch, input_dim = x.shape
    hidden_dim = w1.shape[1]
    output_dim = w2.shape[1]
    compute_dtype = w1.dtype

    tm, batch_p, grid_m = _choose_batch_tile(batch, block_m)

    x = x.astype(compute_dtype)
    if batch_p != batch:
        # Zero-pad only the batch axis (padded rows produce finite values and
        # are sliced off below).
        x = jnp.pad(x, ((0, batch_p - batch), (0, 0)))

    kernel = functools.partial(_mlp_kernel, apply_softmax=apply_softmax)

    out = pl.pallas_call(
        kernel,
        out_shape=jax.ShapeDtypeStruct((batch_p, output_dim), jnp.float32),
        grid_spec=pltpu.PrefetchScalarGridSpec(
            num_scalar_prefetch=0,
            grid=(grid_m,),
            in_specs=[
                # x: one batch tile per grid step (double-buffered by Pallas).
                pl.BlockSpec((tm, input_dim), lambda i: (i, 0)),
                # Weights / biases: constant block index -> VMEM-resident.
                pl.BlockSpec((input_dim, hidden_dim), lambda i: (0, 0)),
                pl.BlockSpec((1, hidden_dim), lambda i: (0, 0)),
                pl.BlockSpec((hidden_dim, output_dim), lambda i: (0, 0)),
                pl.BlockSpec((1, output_dim), lambda i: (0, 0)),
            ],
            out_specs=pl.BlockSpec((tm, output_dim), lambda i: (i, 0)),
        ),
        compiler_params=pltpu.CompilerParams(
            dimension_semantics=("parallel",),
            vmem_limit_bytes=64 * 1024 * 1024,
        ),
    )(x, w1, b1, w2, b2)

    if batch_p != batch:
        out = out[:batch]
    return out


def _reference(x, w1, b1, w2, b2, apply_softmax):
    h = jnp.maximum(x @ w1 + b1, 0.0)
    logits = h @ w2 + b2
    return jax.nn.softmax(logits, axis=1) if apply_softmax else logits


if __name__ == "__main__":
    # Small shapes consistent with the module:
    #   batch=2, input_dim=16 (one-hot-ish surname vector), hidden=32, output=8
    batch, input_dim, hidden_dim, output_dim = 2, 16, 32, 8

    key = jax.random.PRNGKey(0)
    kx, kw1, kb1, kw2, kb2, kx2 = jax.random.split(key, 6)

    x = jax.random.normal(kx, (batch, input_dim), dtype=jnp.float32)
    w1 = jax.random.normal(kw1, (input_dim, hidden_dim), dtype=jnp.float32) * 0.1
    b1 = jax.random.normal(kb1, (hidden_dim,), dtype=jnp.float32) * 0.01
    w2 = jax.random.normal(kw2, (hidden_dim, output_dim), dtype=jnp.float32) * 0.1
    b2 = jax.random.normal(kb2, (output_dim,), dtype=jnp.float32) * 0.01

    # ---- f32 compute path: exact parity with the PyTorch-f32 module ----
    params_f32 = prepare_params(w1, b1, w2, b2, compute_dtype=jnp.float32)

    out_logits = jax.block_until_ready(
        surname_classifier_forward(x, params_f32, apply_softmax=False))
    ref_logits = _reference(x, w1, b1, w2, b2, apply_softmax=False)
    assert out_logits.shape == (batch, output_dim)
    assert jnp.allclose(out_logits, ref_logits, atol=1e-5, rtol=1e-5), \
        "f32 logits path mismatch"

    out_sm = jax.block_until_ready(
        surname_classifier_forward(x, params_f32, apply_softmax=True))
    ref_sm = _reference(x, w1, b1, w2, b2, apply_softmax=True)
    assert jnp.allclose(out_sm, ref_sm, atol=2e-3, rtol=2e-3), \
        "f32 softmax path mismatch (approx reciprocal tolerance)"

    # ---- bf16 compute path (default perf config): looser tolerance ----
    params_bf16 = prepare_params(w1, b1, w2, b2)  # bf16 weights, f32 biases
    out_bf16 = jax.block_until_ready(
        surname_classifier_forward(x, params_bf16, apply_softmax=False))
    assert jnp.allclose(out_bf16, ref_logits, atol=3e-2, rtol=3e-2), \
        "bf16 logits path mismatch"

    # ---- multi-tile batch path: exercises grid_m >= 2 + resident weights ----
    big_batch = 300
    xb = jax.random.normal(kx2, (big_batch, input_dim), dtype=jnp.float32)
    out_big = jax.block_until_ready(
        surname_classifier_forward(xb, params_bf16, apply_softmax=True))
    ref_big = _reference(xb, w1, b1, w2, b2, apply_softmax=True)
    assert out_big.shape == (big_batch, output_dim)
    assert jnp.allclose(out_big, ref_big, atol=2e-2, rtol=2e-2), \
        "tiled batch mismatch"

    print("KERNEL_OK")
</pallas_src>

<mosaic_0001>
module attributes {stable_mosaic.version = 11 : i64} {
  func.func @_mlp_kernel(%arg0: i32, %arg1: memref<2x16xf32, #tpu.memory_space<vmem>>, %arg2: memref<16x32xf32, #tpu.memory_space<vmem>>, %arg3: memref<1x32xf32, #tpu.memory_space<vmem>>, %arg4: memref<32x8xf32, #tpu.memory_space<vmem>>, %arg5: memref<1x8xf32, #tpu.memory_space<vmem>>, %arg6: memref<2x8xf32, #tpu.memory_space<vmem>>) attributes {dimension_semantics = [#tpu.dimension_semantics<parallel>], iteration_bounds = array<i64: 1>, scalar_prefetch = 0 : i64, scratch_operands = 0 : i64, tpu.core_type = #tpu.core_type<tc>, window_params = [{transform_indices = @transform_0, window_bounds = array<i64: 2, 16>}, {pipeline_mode = #tpu.pipeline_mode<synchronous>, transform_indices = @transform_1, window_bounds = array<i64: 16, 32>}, {pipeline_mode = #tpu.pipeline_mode<synchronous>, transform_indices = @transform_2, window_bounds = array<i64: 1, 32>}, {pipeline_mode = #tpu.pipeline_mode<synchronous>, transform_indices = @transform_3, window_bounds = array<i64: 32, 8>}, {pipeline_mode = #tpu.pipeline_mode<synchronous>, transform_indices = @transform_4, window_bounds = array<i64: 1, 8>}, {transform_indices = @transform_5, window_bounds = array<i64: 2, 8>}]} {
    %c0 = arith.constant 0 : index
    %c0_0 = arith.constant 0 : index
    %0 = vector.load %arg1[%c0, %c0_0] : memref<2x16xf32, #tpu.memory_space<vmem>>, vector<2x16xf32>
    %c0_1 = arith.constant 0 : index
    %c0_2 = arith.constant 0 : index
    %1 = vector.load %arg2[%c0_1, %c0_2] : memref<16x32xf32, #tpu.memory_space<vmem>>, vector<16x32xf32>
    %c0_3 = arith.constant 0 : index
    %c0_4 = arith.constant 0 : index
    %2 = vector.load %arg4[%c0_3, %c0_4] : memref<32x8xf32, #tpu.memory_space<vmem>>, vector<32x8xf32>
    %cst = arith.constant dense<0.000000e+00> : vector<2x32xf32>
    %3 = tpu.matmul %0, %1, %cst {dimension_numbers = #tpu.dot_dimension_numbers<[1], [0], [0], [1], [0, 0, 1, 1], [], []>} : vector<2x16xf32>, vector<16x32xf32>, vector<2x32xf32> -> vector<2x32xf32>
    %c0_5 = arith.constant 0 : index
    %c0_6 = arith.constant 0 : index
    %4 = vector.load %arg3[%c0_5, %c0_6] : memref<1x32xf32, #tpu.memory_space<vmem>>, vector<1x32xf32>
    %5 = vector.broadcast %4 : vector<1x32xf32> to vector<2x32xf32>
    %6 = arith.addf %3, %5 : vector<2x32xf32>
    %cst_7 = arith.constant 0.000000e+00 : f32
    %7 = vector.broadcast %cst_7 : f32 to vector<2x32xf32>
    %8 = arith.maximumf %6, %7 : vector<2x32xf32>
    %cst_8 = arith.constant dense<0.000000e+00> : vector<2x8xf32>
    %9 = tpu.matmul %8, %2, %cst_8 {dimension_numbers = #tpu.dot_dimension_numbers<[1], [0], [0], [1], [0, 0, 1, 1], [], []>} : vector<2x32xf32>, vector<32x8xf32>, vector<2x8xf32> -> vector<2x8xf32>
    %c0_9 = arith.constant 0 : index
    %c0_10 = arith.constant 0 : index
    %10 = vector.load %arg5[%c0_9, %c0_10] : memref<1x8xf32, #tpu.memory_space<vmem>>, vector<1x8xf32>
    %11 = vector.broadcast %10 : vector<1x8xf32> to vector<2x8xf32>
    %12 = arith.addf %9, %11 : vector<2x8xf32>
    %c0_11 = arith.constant 0 : index
    %c0_12 = arith.constant 0 : index
    %13 = vector.load %arg6[%c0_11, %c0_12] : memref<2x8xf32, #tpu.memory_space<vmem>>, vector<2x8xf32>
    tpu.vector_store %arg6[%c0_11, %c0_12], %12 {strides = array<i32>} : memref<2x8xf32, #tpu.memory_space<vmem>>, vector<2x8xf32>,
    return
  }
  func.func @transform_0(%arg0: i32) -> (i32, i32) {
    %c0_i32 = arith.constant 0 : i32
    %c0_i32_0 = arith.constant 0 : i32
    return %arg0, %c0_i32 : i32, i32
  }
  func.func @transform_1(%arg0: i32) -> (i32, i32) {
    %c0_i32 = arith.constant 0 : i32
    %c0_i32_0 = arith.constant 0 : i32
    %c0_i32_1 = arith.constant 0 : i32
    return %c0_i32, %c0_i32_0 : i32, i32
  }
  func.func @transform_2(%arg0: i32) -> (i32, i32) {
    %c0_i32 = arith.constant 0 : i32
    %c0_i32_0 = arith.constant 0 : i32
    %c0_i32_1 = arith.constant 0 : i32
    return %c0_i32, %c0_i32_0 : i32, i32
  }
  func.func @transform_3(%arg0: i32) -> (i32, i32) {
    %c0_i32 = arith.constant 0 : i32
    %c0_i32_0 = arith.constant 0 : i32
    %c0_i32_1 = arith.constant 0 : i32
    return %c0_i32, %c0_i32_0 : i32, i32
  }
  func.func @transform_4(%arg0: i32) -> (i32, i32) {
    %c0_i32 = arith.constant 0 : i32
    %c0_i32_0 = arith.constant 0 : i32
    %c0_i32_1 = arith.constant 0 : i32
    return %c0_i32, %c0_i32_0 : i32, i32
  }
  func.func @transform_5(%arg0: i32) -> (i32, i32) {
    %c0_i32 = arith.constant 0 : i32
    %c0_i32_0 = arith.constant 0 : i32
    return %arg0, %c0_i32 : i32, i32
  }
}

</mosaic_0001>

<llo_original>
// kernel: tpu_custom_call.1
$region0: #{tpu_custom_call.1}
  #allocation0 [shape = 'u32[]', space=smem, size = 0x4, offset = 0x4, fixed_abs, tag = 'smem constant byte address 0x4 - core index']
  #allocation1 [shape = 'u32[144,128]{1,0:T(1,128)}', space=vmem, size = 0x12000, scoped, tag = 'internal scratch']
  %s0 = inlined_call_operand.hbm [shape: f32[2,16], index: 0, kind: input, shape index: {}]
  %s1 = inlined_call_operand.hbm [shape: f32[16,32], index: 1, kind: input, shape index: {}]
  %s2 = inlined_call_operand.hbm [shape: f32[1,32], index: 2, kind: input, shape index: {}]
  %s3 = inlined_call_operand.hbm [shape: f32[32,8], index: 3, kind: input, shape index: {}]
  %s4 = inlined_call_operand.hbm [shape: f32[1,8], index: 4, kind: input, shape index: {}]
  %s5 = inlined_call_operand.hbm [shape: f32[2,8], index: 5, kind: output, shape index: {}]
  %s6 = sld [smem:[#allocation0]]
  $region50: #{tpu_custom_call.1} parent=0
    _
  %s8 = ssub.s32 1, %s6
  %s9 = scalar_select 0, %s8, %s6
  $region1: #{tpu_custom_call.1} parent=0
    #allocation2 [shape = 'u8[1024]{0}', space=vmem, size = 0x400, scoped, tag = 'input window, operand 0, single buffered']
    #allocation3 [shape = 's32[1]{0}', space=sflag, size = 0x4, scoped, tag = 'scoped memory for tpu_custom_call.1']
    #allocation4 [shape = 's32[1]{0}', space=sflag, size = 0x4, scoped, tag = 'scoped memory for tpu_custom_call.1']
    #allocation5 [shape = 'u8[8192]{0}', space=vmem, size = 0x2000, scoped, tag = 'input window, operand 1, single buffered']
    #allocation6 [shape = 's32[1]{0}', space=sflag, size = 0x4, scoped, tag = 'scoped memory for tpu_custom_call.1']
    #allocation7 [shape = 'u8[512]{0}', space=vmem, size = 0x400, scoped, tag = 'input window, operand 2, single buffered']
    #allocation8 [shape = 'u8[16384]{0}', space=vmem, size = 0x4000, scoped, tag = 'input window, operand 3, single buffered']
    #allocation9 [shape = 's32[1]{0}', space=sflag, size = 0x4, scoped, tag = 'scoped memory for tpu_custom_call.1']
    #allocation10 [shape = 'u8[512]{0}', space=vmem, size = 0x400, scoped, tag = 'input window, operand 4, single buffered']
    #allocation11 [shape = 'u8[1024]{0}', space=vmem, size = 0x400, scoped, tag = 'output window, operand 0, single buffered']
    %10 = vsyncpa [#allocation3], 0
    %11 = vsyncpa [#allocation6], 0
    %12 = vsyncpa [#allocation9], 0
    %13 = vsyncpa [#allocation4], 0
    // Predicated region
    $region2: #{tpu_custom_call.1} parent=1 // pred_check
      _
    $region3: #{tpu_custom_call.1} parent=1 // pred_check_branch
      %15 = sbr.rel (0) target = $region5
    $region4: #{tpu_custom_call.1} parent=1 // pred_region
      %s17 = ssub.s32 32, 32
      %18 = vsyncadd [#allocation3], %s17
      %s20 = sshll.u32 [#allocation2], 4
      %s21 = int_to_ptr.vmem [resolvable:$true] %s20
      %23 = dma.hbm_to_vmem [thread:$0]  %s0, 32, %s21, [#allocation3]
    $region5: #{tpu_custom_call.1} parent=1 // pred_fallthru
      _
    // Predicated region
    $region6: #{tpu_custom_call.1} parent=1 // pred_check
      _
    $region7: #{tpu_custom_call.1} parent=1 // pred_check_branch
      %25 = sbr.rel (0) target = $region9
    $region8: #{tpu_custom_call.1} parent=1 // pred_region
      %s27 = ssub.s32 256, 256
      %28 = vsyncadd [#allocation6], %s27
      %s29 = sshll.u32 [#allocation5], 4
      %s30 = int_to_ptr.vmem [resolvable:$true] %s29
      %35 = dma.hbm_to_vmem [thread:$0]  %s1, 256, %s30, [#allocation6], 128, 128, 8
    $region9: #{tpu_custom_call.1} parent=1 // pred_fallthru
      _
    // Predicated region
    $region10: #{tpu_custom_call.1} parent=1 // pred_check
      _
    $region11: #{tpu_custom_call.1} parent=1 // pred_check_branch
      %37 = sbr.rel (0) target = $region13
    $region12: #{tpu_custom_call.1} parent=1 // pred_region
      %s39 = ssub.s32 16, 16
      %40 = vsyncadd [#allocation6], %s39
      %s42 = sshll.u32 [#allocation7], 4
      %s43 = int_to_ptr.vmem [resolvable:$true] %s42
      %45 = dma.hbm_to_vmem [thread:$0]  %s2, 16, %s43, [#allocation6]
    $region13: #{tpu_custom_call.1} parent=1 // pred_fallthru
      _
    // Predicated region
    $region14: #{tpu_custom_call.1} parent=1 // pred_check
      _
    $region15: #{tpu_custom_call.1} parent=1 // pred_check_branch
      %47 = sbr.rel (0) target = $region17
    $region16: #{tpu_custom_call.1} parent=1 // pred_region
      %s49 = ssub.s32 512, 512
      %50 = vsyncadd [#allocation9], %s49
      %s51 = sshll.u32 [#allocation8], 4
      %s52 = int_to_ptr.vmem [resolvable:$true] %s51
      %57 = dma.hbm_to_vmem [thread:$0]  %s3, 512, %s52, [#allocation9], 128, 128, 8
    $region17: #{tpu_custom_call.1} parent=1 // pred_fallthru
      _
    // Predicated region
    $region18: #{tpu_custom_call.1} parent=1 // pred_check
      _
    $region19: #{tpu_custom_call.1} parent=1 // pred_check_branch
      %59 = sbr.rel (0) target = $region21
    $region20: #{tpu_custom_call.1} parent=1 // pred_region
      %s61 = ssub.s32 16, 16
      %62 = vsyncadd [#allocation9], %s61
      %s64 = sshll.u32 [#allocation10], 4
      %s65 = int_to_ptr.vmem [resolvable:$true] %s64
      %67 = dma.hbm_to_vmem [thread:$0]  %s4, 16, %s65, [#allocation9]
    $region21: #{tpu_custom_call.1} parent=1 // pred_fallthru
      _
    // Predicated region
    $region22: #{tpu_custom_call.1} parent=1 // pred_check
      _
    $region23: #{tpu_custom_call.1} parent=1 // pred_check_branch
      %69 = sbr.rel (0) target = $region25
    $region24: #{tpu_custom_call.1} parent=1 // pred_region
      %70 = dma.done [#allocation3], 32
    $region25: #{tpu_custom_call.1} parent=1 // pred_fallthru
      _
    // Predicated region
    $region26: #{tpu_custom_call.1} parent=1 // pred_check
      _
    $region27: #{tpu_custom_call.1} parent=1 // pred_check_branch
      %72 = sbr.rel (0) target = $region29
    $region28: #{tpu_custom_call.1} parent=1 // pred_region
      %73 = dma.done [#allocation6], 256
    $region29: #{tpu_custom_call.1} parent=1 // pred_fallthru
      _
    // Predicated region
    $region30: #{tpu_custom_call.1} parent=1 // pred_check
      _
    $region31: #{tpu_custom_call.1} parent=1 // pred_check_branch
      %75 = sbr.rel (0) target = $region33
    $region32: #{tpu_custom_call.1} parent=1 // pred_region
      %76 = dma.done [#allocation6], 16
    $region33: #{tpu_custom_call.1} parent=1 // pred_fallthru
      _
    // Predicated region
    $region34: #{tpu_custom_call.1} parent=1 // pred_check
      _
    $region35: #{tpu_custom_call.1} parent=1 // pred_check_branch
      %78 = sbr.rel (0) target = $region37
    $region36: #{tpu_custom_call.1} parent=1 // pred_region
      %79 = dma.done [#allocation9], 512
    $region37: #{tpu_custom_call.1} parent=1 // pred_fallthru
      _
    // Predicated region
    $region38: #{tpu_custom_call.1} parent=1 // pred_check
      _
    $region39: #{tpu_custom_call.1} parent=1 // pred_check_branch
      %81 = sbr.rel (0) target = $region41
    $region40: #{tpu_custom_call.1} parent=1 // pred_region
      %82 = dma.done [#allocation9], 16
    $region41: #{tpu_custom_call.1} parent=1 // pred_fallthru
      _
    %v83 = vld [vmem:[#allocation2] sm:$0x3]
    %v84 = vld [vmem:[#allocation5] sm:$0xff]
    %v85 = vld [vmem:[#allocation5 + $0x8] sm:$0xff]
    %v86 = vld [vmem:[#allocation8] sm:$0xff]
    %v87 = vld [vmem:[#allocation8 + $0x8] sm:$0xff]
    %v88 = vld [vmem:[#allocation8 + $0x10] sm:$0xff]
    %v89 = vld [vmem:[#allocation8 + $0x18] sm:$0xff]
    %v90 = vld [vmem:[#allocation7] sm:$0x1]
    %v92 = vlaneseq
    %v93 = vshrl.u32 %v92, 7
    %v94 = vsub.s32 0, %v93
    %v95 = vrot.slane %v90, %v94
    %vm97 = vcmask 130048
    %v99 = vsel %vm97, %v83, 0
    %101 = vmatprep.subr.mxu0 0.0
    %102 = vmatpush1.msra.mxu0 %v84
    %103 = vmatprep.subr.mxu0 0.0
    %104 = vmatpush1.msra.mxu0 %v85
    %105 = vmatprep.subr.mxu0 0.0
    %106 = vmatpush1.msra.mxu0 0.0
    %107 = vmatprep.subr.mxu0 0.0
    %108 = vmatpush1.msra.mxu0 0.0
    %109 = vmatprep.subr.mxu0 0.0
    %110 = vmatpush1.msra.mxu0 0.0
    %111 = vmatprep.subr.mxu0 0.0
    %112 = vmatpush1.msra.mxu0 0.0
    %113 = vmatprep.subr.mxu0 0.0
    %114 = vmatpush1.msra.mxu0 0.0
    %115 = vmatprep.subr.mxu0 0.0
    %116 = vmatpush1.msra.mxu0 0.0
    %117 = vmatprep.subr.mxu0 0.0
    %118 = vmatpush1.msra.mxu0 0.0
    %119 = vmatprep.subr.mxu0 0.0
    %120 = vmatpush1.msra.mxu0 0.0
    %121 = vmatprep.subr.mxu0 0.0
    %122 = vmatpush1.msra.mxu0 0.0
    %123 = vmatprep.subr.mxu0 0.0
    %124 = vmatpush1.msra.mxu0 0.0
    %125 = vmatprep.subr.mxu0 0.0
    %126 = vmatpush1.msra.mxu0 0.0
    %127 = vmatprep.subr.mxu0 0.0
    %128 = vmatpush1.msra.mxu0 0.0
    %129 = vmatprep.subr.mxu0 0.0
    %130 = vmatpush1.msra.mxu0 0.0
    %131 = vmatprep.subr.mxu0 0.0
    %132 = vmatpush1.msra.mxu0 0.0
    %133 = vmatprep.subr.mxu0 0.0
    %134 = vmatpush1.msra.mxu0 0.0
    %135 = vmatprep.subr.mxu0 0.0
    %136 = vmatpush1.msra.mxu0 0.0
    %137 = vmatprep.subr.mxu0 0.0
    %138 = vmatpush1.msra.mxu0 0.0
    %139 = vmatprep.subr.mxu0 0.0
    %140 = vmatpush1.msra.mxu0 0.0
    %141 = vmatprep.subr.mxu0 0.0
    %142 = vmatpush1.msra.mxu0 0.0
    %143 = vmatprep.subr.mxu0 0.0
    %144 = vmatpush1.msra.mxu0 0.0
    %145 = vmatprep.subr.mxu0 0.0
    %146 = vmatpush1.msra.mxu0 0.0
    %147 = vmatprep.subr.mxu0 0.0
    %148 = vmatpush1.msra.mxu0 0.0
    %149 = vmatprep.subr.mxu0 0.0
    %150 = vmatpush1.msra.mxu0 0.0
    %151 = vmatprep.subr.mxu0 0.0
    %152 = vmatpush1.msra.mxu0 0.0
    %153 = vmatprep.subr.mxu0 0.0
    %154 = vmatpush1.msra.mxu0 0.0
    %155 = vmatprep.subr.mxu0 0.0
    %156 = vmatpush1.msra.mxu0 0.0
    %157 = vmatprep.subr.mxu0 0.0
    %158 = vmatpush1.msra.mxu0 0.0
    %159 = vmatprep.subr.mxu0 0.0
    %160 = vmatpush1.msra.mxu0 0.0
    %161 = vmatprep.subr.mxu0 0.0
    %162 = vmatpush1.msra.mxu0 0.0
    %163 = vmatprep.subr.mxu0 0.0
    %164 = vmatpush1.msra.mxu0 0.0
    %165 = vmatprep.mubr.f32.mxu0 0.0
    %166 = vmatmul.mubr.f32.gmra.mrb[0].mxu0 %v99
    %v167 = vpop.f32.mrb[0].mxu0
    %v168 = vadd.f32 %v95, %v167
    %v169 = vpop.f32.mrb[0].mxu0
    %170 = vdwg.mxu0
    %v171 = vmax.f32 %v168, 0.0
    %v172 = vld [vmem:[#allocation10] sm:$0x1]
    %v174 = vlaneseq
    %v175 = vshrl.u32 %v174, 7
    %v176 = vsub.s32 0, %v175
    %v177 = vrot.slane %v172, %v176
    %vm179 = vcmask 261120
    %v181 = vsel %vm179, %v171, 0
    %183 = vmatprep.subr.mxu0 0.0
    %184 = vmatpush1.msra.mxu0 %v86
    %185 = vmatprep.subr.mxu0 0.0
    %186 = vmatpush1.msra.mxu0 %v87
    %187 = vmatprep.subr.mxu0 0.0
    %188 = vmatpush1.msra.mxu0 %v88
    %189 = vmatprep.subr.mxu0 0.0
    %190 = vmatpush1.msra.mxu0 %v89
    %191 = vmatprep.subr.mxu0 0.0
    %192 = vmatpush1.msra.mxu0 0.0
    %193 = vmatprep.subr.mxu0 0.0
    %194 = vmatpush1.msra.mxu0 0.0
    %195 = vmatprep.subr.mxu0 0.0
    %196 = vmatpush1.msra.mxu0 0.0
    %197 = vmatprep.subr.mxu0 0.0
    %198 = vmatpush1.msra.mxu0 0.0
    %199 = vmatprep.subr.mxu0 0.0
    %200 = vmatpush1.msra.mxu0 0.0
    %201 = vmatprep.subr.mxu0 0.0
    %202 = vmatpush1.msra.mxu0 0.0
    %203 = vmatprep.subr.mxu0 0.0
    %204 = vmatpush1.msra.mxu0 0.0
    %205 = vmatprep.subr.mxu0 0.0
    %206 = vmatpush1.msra.mxu0 0.0
    %207 = vmatprep.subr.mxu0 0.0
    %208 = vmatpush1.msra.mxu0 0.0
    %209 = vmatprep.subr.mxu0 0.0
    %210 = vmatpush1.msra.mxu0 0.0
    %211 = vmatprep.subr.mxu0 0.0
    %212 = vmatpush1.msra.mxu0 0.0
    %213 = vmatprep.subr.mxu0 0.0
    %214 = vmatpush1.msra.mxu0 0.0
    %215 = vmatprep.subr.mxu0 0.0
    %216 = vmatpush1.msra.mxu0 0.0
    %217 = vmatprep.subr.mxu0 0.0
    %218 = vmatpush1.msra.mxu0 0.0
    %219 = vmatprep.subr.mxu0 0.0
    %220 = vmatpush1.msra.mxu0 0.0
    %221 = vmatprep.subr.mxu0 0.0
    %222 = vmatpush1.msra.mxu0 0.0
    %223 = vmatprep.subr.mxu0 0.0
    %224 = vmatpush1.msra.mxu0 0.0
    %225 = vmatprep.subr.mxu0 0.0
    %226 = vmatpush1.msra.mxu0 0.0
    %227 = vmatprep.subr.mxu0 0.0
    %228 = vmatpush1.msra.mxu0 0.0
    %229 = vmatprep.subr.mxu0 0.0
    %230 = vmatpush1.msra.mxu0 0.0
    %231 = vmatprep.subr.mxu0 0.0
    %232 = vmatpush1.msra.mxu0 0.0
    %233 = vmatprep.subr.mxu0 0.0
    %234 = vmatpush1.msra.mxu0 0.0
    %235 = vmatprep.subr.mxu0 0.0
    %236 = vmatpush1.msra.mxu0 0.0
    %237 = vmatprep.subr.mxu0 0.0
    %238 = vmatpush1.msra.mxu0 0.0
    %239 = vmatprep.subr.mxu0 0.0
    %240 = vmatpush1.msra.mxu0 0.0
    %241 = vmatprep.subr.mxu0 0.0
    %242 = vmatpush1.msra.mxu0 0.0
    %243 = vmatprep.subr.mxu0 0.0
    %244 = vmatpush1.msra.mxu0 0.0
    %245 = vmatprep.subr.mxu0 0.0
    %246 = vmatpush1.msra.mxu0 0.0
    %247 = vmatprep.mubr.f32.mxu0 0.0
    %248 = vmatmul.mubr.f32.gmra.mrb[0].mxu0 %v181
    %v249 = vpop.f32.mrb[0].mxu0
    %v250 = vadd.f32 %v177, %v249
    %v251 = vpop.f32.mrb[0].mxu0
    %252 = vdwg.mxu0
    %vm253 = vcmask 58368
    %254 = vst.msk [vmem:[#allocation11] sm:$0x3] %vm253, %v250
    // Predicated region
    $region42: #{tpu_custom_call.1} parent=1 // pred_check
      _
    $region43: #{tpu_custom_call.1} parent=1 // pred_check_branch
      %256 = sbr.rel (0) target = $region45
    $region44: #{tpu_custom_call.1} parent=1 // pred_region
      %s258 = ssub.s32 32, 32
      %259 = vsyncadd [#allocation4], %s258
      %s261 = sshll.u32 [#allocation11], 4
      %s262 = int_to_ptr.vmem [resolvable:$true] %s261
      %264 = dma.vmem_to_hbm [thread:$0]  %s262, 32, %s5, [#allocation4]
    $region45: #{tpu_custom_call.1} parent=1 // pred_fallthru
      _
    // Predicated region
    $region46: #{tpu_custom_call.1} parent=1 // pred_check
      _
    $region47: #{tpu_custom_call.1} parent=1 // pred_check_branch
      %266 = sbr.rel (0) target = $region49
    $region48: #{tpu_custom_call.1} parent=1 // pred_region
      %267 = dma.done [#allocation4], 32
    $region49: #{tpu_custom_call.1} parent=1 // pred_fallthru
      _
    %268 = vsyncpa [#allocation3], 1
    %269 = vsyncpa [#allocation6], 1
    %270 = vsyncpa [#allocation9], 1
    %271 = vsyncpa [#allocation4], 1

</llo_original>
